<compile_context>
chip_gen: v7x
topology: tpu7x:2x2x1
jax: 0.10.0
libtpu: 0.0.40
codegen_flags: <defaults>
</compile_context>

<pallas_src>
import functools

import jax
import jax.numpy as jnp
from jax import lax
from jax.experimental import pallas as pl
from jax.experimental.pallas import tpu as pltpu


_STRIP_TARGET_BYTES = 512 * 1024     # per-strip compute tile (bounds vreg/VMEM pressure)
_MAX_STRIPS = 16                     # strips per DMA block
_MIN_GRID_STEPS = 8                  # enough steps for v7x megacore + pipelining


def _cdiv(a, b):
    return -(-a // b)


def _sublane_multiple(dtype):
    # second-to-last block dim must be a multiple of this (unless full-dim)
    return {4: 8, 2: 16, 1: 32}.get(jnp.dtype(dtype).itemsize, 8)


def _block_target_bytes():
    """Per-block byte target, chosen per chip generation (feedback items 3/6/7)."""
    try:
        info = pltpu.get_tpu_info()
        vmem = getattr(info, "vmem_capacity_bytes", None)
        if vmem is not None and vmem >= 96 * 1024 * 1024:
            return 8 * 1024 * 1024        # v5e / v6e: 128 MiB VMEM
    except Exception:
        pass
    return 4 * 1024 * 1024                # v7x (64 MiB VMEM) / unknown


@functools.lru_cache(maxsize=None)
def _roll_matches_jnp_convention():
    """True iff pltpu.roll(x, +1, axis=-1) moves data toward higher lane
    indices (jnp.roll convention).  One tiny on-device probe, cached."""
    def probe(x_ref, o_ref):
        o_ref[...] = pltpu.roll(x_ref[...], 1, axis=1)

    x = jnp.broadcast_to(jnp.arange(128, dtype=jnp.int32), (8, 128))
    out = pl.pallas_call(
        probe, out_shape=jax.ShapeDtypeStruct((8, 128), jnp.int32))(x)
    return int(out[0, 0]) == 127


def _make_kernel(*, seg_w, lane_dim, strip_axis, strip_len, n_strips,
                 roll_like_jnp):
    """Build the flip kernel, specialized on static tiling parameters."""

    def reverse_w(x):
        # Reverse each contiguous seg_w-lane segment of the minor axis.
        if seg_w == lane_dim:
            return x[..., ::-1]                      # plain full-lane reverse
        # Butterfly: log2(seg_w) stages of swapping adjacent b-lane blocks
        # (lane -> lane XOR b), built from two XLU rolls + one VPU select.
        lane = lax.broadcasted_iota(jnp.int32, (1, 1, lane_dim), 2)
        y = x
        b = seg_w // 2
        while b >= 1:
            s_plus = (lane_dim - b) if roll_like_jnp else b    # source l + b
            s_minus = b if roll_like_jnp else (lane_dim - b)   # source l - b
            from_right = pltpu.roll(y, s_plus, axis=2)
            from_left = pltpu.roll(y, s_minus, axis=2)
            y = jnp.where((lane & b) == 0, from_right, from_left)
            b //= 2
        return y

    def one_strip(flag_ref, x_ref, o_ref, s):
        off = pl.multiple_of(s * strip_len, strip_len)
        if strip_axis == 0:                          # strip = group of images
            x = x_ref[pl.ds(off, strip_len)]
            flip = flag_ref[pl.ds(off, strip_len)] != 0      # (strip_len,1,1)
            o_ref[pl.ds(off, strip_len)] = jnp.where(flip, reverse_w(x), x)
        else:                                        # strip = row slab of one image
            x = x_ref[:, pl.ds(off, strip_len), :]
            flip = flag_ref[...] != 0                        # (1,1,1)
            o_ref[:, pl.ds(off, strip_len), :] = jnp.where(flip, reverse_w(x), x)

    def kernel(flag_ref, x_ref, o_ref):
        if n_strips == 1:
            x = x_ref[...]
            flip = flag_ref[...] != 0                # (bn,1,1) broadcast select
            o_ref[...] = jnp.where(flip, reverse_w(x), x)
        else:
            # fori_loop (not a Python loop) so each ~512 KiB strip's live
            # range is bounded (feedback item 8).
            def body(s, carry):
                one_strip(flag_ref, x_ref, o_ref, s)
                return carry
            lax.fori_loop(0, n_strips, body, 0, unroll=False)

    return kernel


def random_hflip_with_pose(image, flip_flag=None, *, key=None, p=0.5):
    """Pallas equivalent of RandomHorizontalFlipWithPose.forward.

    image:     (N, C, H, W) array
    flip_flag: (N,) bool/int array; True => horizontally flip that image.
               If None, flags are sampled host-side with `key` (like the module).
    """
    n, c, h, w = image.shape
    dtype = image.dtype
    itemsize = jnp.dtype(dtype).itemsize
    sub = _sublane_multiple(dtype)

    if flip_flag is None:
        if key is None:
            raise ValueError("flip_flag is None: provide a PRNG key")
        flip_flag = get_flip_flag(key, n, p=p)
    assert flip_flag.shape[0] == n

    # ---- layout: lane-dense fold for small W (feedback item 5) -------------
    if (w < 128 and 128 % w == 0 and (c * h) % (128 // w) == 0
            and itemsize >= 2):
        lane_dim, seg_w = 128, w
        rows = (c * h * w) // 128
    else:
        lane_dim, seg_w = w, w
        rows = c * h

    x3 = image.reshape(n, rows, lane_dim)            # contiguous reshape (free)
    flag3 = flip_flag.astype(jnp.int32).reshape(n, 1, 1)

    roll_like_jnp = True
    if seg_w != lane_dim:
        roll_like_jnp = _roll_matches_jnp_convention()

    # ---- block / strip selection (feedback items 2, 4, 6, 7, 8) ------------
    block_target = _block_target_bytes()
    row_bytes = lane_dim * itemsize
    img_bytes = rows * row_bytes

    if img_bytes <= block_target:
        # Case A: pack whole images per block; one strip = a group of images.
        strip_len = max(1, min(n, _STRIP_TARGET_BYTES // img_bytes))
        n_strips = max(1, min(block_target // max(1, strip_len * img_bytes),
                              n // strip_len, _MAX_STRIPS))
        bn = strip_len * n_strips
        tr = rows
        strip_axis = 0
        grid = (_cdiv(n, bn), 1)
        while grid[0] < _MIN_GRID_STEPS and n_strips > 1:
            n_strips = max(1, n_strips // 2)
            bn = strip_len * n_strips
            grid = (_cdiv(n, bn), 1)
        while grid[0] < _MIN_GRID_STEPS and strip_len > 1:
            strip_len = max(1, strip_len // 2)
            bn = strip_len * n_strips
            grid = (_cdiv(n, bn), 1)
    else:
        # Case B: one image per block; tile + strip the row (sublane) axis.
        strip_len = max(sub, (_STRIP_TARGET_BYTES // row_bytes) // sub * sub)
        strip_len = min(strip_len, rows)
        n_strips = max(1, min(block_target // max(1, strip_len * row_bytes),
                              _MAX_STRIPS))
        bn = 1
        tr = strip_len * n_strips
        if tr >= rows:                                # safety for odd shapes
            tr, n_strips, strip_len = rows, 1, rows
        strip_axis = 1
        grid = (n, _cdiv(rows, tr))
        while n * grid[1] < _MIN_GRID_STEPS and n_strips > 1:
            n_strips = max(1, n_strips // 2)
            tr = strip_len * n_strips
            grid = (n, _cdiv(rows, tr))

    block_bytes = bn * tr * lane_dim * itemsize
    flag_block_bytes = bn * 8 * 128 * 4               # padded (bn,1,1) layout
    vmem_limit = int(max(32 * 1024 * 1024,
                         4 * (block_bytes + flag_block_bytes) + (4 << 20)))

    kernel = _make_kernel(seg_w=seg_w, lane_dim=lane_dim,
                          strip_axis=strip_axis, strip_len=strip_len,
                          n_strips=n_strips, roll_like_jnp=roll_like_jnp)

    data_spec = pl.BlockSpec((bn, tr, lane_dim), lambda i, j: (i, j, 0))
    flag_spec = pl.BlockSpec((bn, 1, 1), lambda i, j: (i, 0, 0))

    out3 = pl.pallas_call(
        kernel,
        out_shape=jax.ShapeDtypeStruct(x3.shape, x3.dtype),
        grid=grid,
        in_specs=[flag_spec, data_spec],
        out_specs=data_spec,
        compiler_params=pltpu.CompilerParams(
            dimension_semantics=("parallel", "parallel"),
            vmem_limit_bytes=vmem_limit,
        ),
        cost_estimate=pl.CostEstimate(
            flops=0, transcendentals=0,
            bytes_accessed=2 * image.size * itemsize + n * 4),
    )(flag3, x3)

    return out3.reshape(n, c, h, w)


def get_flip_flag(key, n_image, p=0.5):
    """Mirrors RandomHorizontalFlipWithPose.get_flip_flag (torch.rand(n) < p)."""
    return jax.random.uniform(key, (n_image,)) < p


if __name__ == "__main__":
    key = jax.random.PRNGKey(0)
    k_img, k_flag = jax.random.split(key)

    N, C, H, W = 2, 4, 16, 16
    image = jax.random.normal(k_img, (N, C, H, W), dtype=jnp.float32)
    flip_flag = get_flip_flag(k_flag, N, p=0.5)

    out = jax.block_until_ready(random_hflip_with_pose(image, flip_flag))

    # Reference: per-image conditional flip along W.
    ref = jnp.where(flip_flag[:, None, None, None], image[..., ::-1], image)
    assert out.shape == image.shape and out.dtype == image.dtype
    assert jnp.array_equal(out, ref)

    print("KERNEL_OK")
</pallas_src>

<mosaic_0001>
module attributes {stable_mosaic.version = 11 : i64} {
  func.func @probe(%arg0: memref<8x128xi32, #tpu.memory_space<vmem>>, %arg1: memref<8x128xi32, #tpu.memory_space<vmem>>) attributes {dimension_semantics = [], scalar_prefetch = 0 : i64, scratch_operands = 0 : i64, tpu.core_type = #tpu.core_type<tc>} {
    %c0 = arith.constant 0 : index
    %c0_0 = arith.constant 0 : index
    %0 = vector.load %arg0[%c0, %c0_0] : memref<8x128xi32, #tpu.memory_space<vmem>>, vector<8x128xi32>
    %c1_i32 = arith.constant 1 : i32
    %1 = tpu.dynamic_rotate %0 by %c1_i32 dim 1 : vector<8x128xi32>, i32 -> vector<8x128xi32>
    %c0_1 = arith.constant 0 : index
    %c0_2 = arith.constant 0 : index
    %2 = vector.load %arg1[%c0_1, %c0_2] : memref<8x128xi32, #tpu.memory_space<vmem>>, vector<8x128xi32>
    tpu.vector_store %arg1[%c0_1, %c0_2], %1 {strides = array<i32>} : memref<8x128xi32, #tpu.memory_space<vmem>>, vector<8x128xi32>,
    return
  }
}

</mosaic_0001>

<llo_original>
// kernel: tpu_custom_call.1
$region0: #{tpu_custom_call.1}
  #allocation0 [shape = 'u32[]', space=smem, size = 0x4, offset = 0x4, fixed_abs, tag = 'smem constant byte address 0x4 - core index']
  #allocation1 [shape = 'u32[144,128]{1,0:T(1,128)}', space=vmem, size = 0x12000, scoped, tag = 'internal scratch']
  %s0 = inlined_call_operand.hbm [shape: s32[8,128], index: 0, kind: input, shape index: {}]
  %s1 = inlined_call_operand.hbm [shape: s32[8,128], index: 1, kind: output, shape index: {}]
  %s2 = sld [smem:[#allocation0]]
  $region18: #{tpu_custom_call.1} parent=0
    _
  %s4 = ssub.s32 1, %s2
  %s5 = scalar_select 0, %s4, %s2
  $region1: #{tpu_custom_call.1} parent=0
    #allocation2 [shape = 'u8[4096]{0}', space=vmem, size = 0x1000, scoped, tag = 'input window, operand 0, single buffered']
    #allocation3 [shape = 's32[1]{0}', space=sflag, size = 0x4, scoped, tag = 'scoped memory for tpu_custom_call.1']
    #allocation4 [shape = 's32[1]{0}', space=sflag, size = 0x4, scoped, tag = 'scoped memory for tpu_custom_call.1']
    #allocation5 [shape = 'u8[4096]{0}', space=vmem, size = 0x1000, scoped, tag = 'output window, operand 0, single buffered']
    %6 = vsyncpa [#allocation3], 0
    %7 = vsyncpa [#allocation4], 0
    // Predicated region
    $region2: #{tpu_custom_call.1} parent=1 // pred_check
      _
    $region3: #{tpu_custom_call.1} parent=1 // pred_check_branch
      %9 = sbr.rel (0) target = $region5
    $region4: #{tpu_custom_call.1} parent=1 // pred_region
      %s11 = ssub.s32 128, 128
      %12 = vsyncadd [#allocation3], %s11
      %s14 = sshll.u32 [#allocation2], 4
      %s15 = int_to_ptr.vmem [resolvable:$true] %s14
      %17 = dma.hbm_to_vmem [thread:$0]  %s0, 128, %s15, [#allocation3]
    $region5: #{tpu_custom_call.1} parent=1 // pred_fallthru
      _
    // Predicated region
    $region6: #{tpu_custom_call.1} parent=1 // pred_check
      _
    $region7: #{tpu_custom_call.1} parent=1 // pred_check_branch
      %19 = sbr.rel (0) target = $region9
    $region8: #{tpu_custom_call.1} parent=1 // pred_region
      %20 = dma.done [#allocation3], 128
    $region9: #{tpu_custom_call.1} parent=1 // pred_fallthru
      _
    %v21 = vld [vmem:[#allocation2] sm:$0xff]
    %22 = vrot.lane.b32.xlu0 %v21, 1
    %v23 = vpop.permute.xlu0 %22
    %24 = vst [vmem:[#allocation5] sm:$0xff] %v23
    // Predicated region
    $region10: #{tpu_custom_call.1} parent=1 // pred_check
      _
    $region11: #{tpu_custom_call.1} parent=1 // pred_check_branch
      %26 = sbr.rel (0) target = $region13
    $region12: #{tpu_custom_call.1} parent=1 // pred_region
      %s28 = ssub.s32 128, 128
      %29 = vsyncadd [#allocation4], %s28
      %s31 = sshll.u32 [#allocation5], 4
      %s32 = int_to_ptr.vmem [resolvable:$true] %s31
      %34 = dma.vmem_to_hbm [thread:$0]  %s32, 128, %s1, [#allocation4]
    $region13: #{tpu_custom_call.1} parent=1 // pred_fallthru
      _
    // Predicated region
    $region14: #{tpu_custom_call.1} parent=1 // pred_check
      _
    $region15: #{tpu_custom_call.1} parent=1 // pred_check_branch
      %36 = sbr.rel (0) target = $region17
    $region16: #{tpu_custom_call.1} parent=1 // pred_region
      %37 = dma.done [#allocation4], 128
    $region17: #{tpu_custom_call.1} parent=1 // pred_fallthru
      _
    %38 = vsyncpa [#allocation3], 1
    %39 = vsyncpa [#allocation4], 1

</llo_original>
